<compile_context>
chip_gen: v7x
topology: tpu7x:2x2x1
jax: 0.10.0
libtpu: 0.0.40
codegen_flags: <defaults>
</compile_context>

<pallas_src>
import warnings

import jax
import jax.numpy as jnp
from jax.experimental import pallas as pl
from jax.experimental.pallas import tpu as pltpu

LANE = 128          # vreg lane width -> unmasked vld/vst
DEFAULT_TM = 4096   # rows per block: 4096 * 128 * 4 B = 2 MiB f32 per buffer.
                    # ~8 MiB VMEM with double-buffered in + (aliased) out:
                    # fits v5e's 16 MiB default scoped VMEM, v6e/v7x's 32 MiB.
                    # (Physical VMEM: v5e/v6e 128 MiB, v7x 64 MiB per TC.)


def add_bias_kernel(x_ref, b_ref, o_ref):
    # Scalar bias lives in SMEM; hoisted once, then a single VPU broadcast-add.
    o_ref[...] = x_ref[...] + b_ref[0]


def mylinear_forward(x, w, b, *, tm=DEFAULT_TM, core_parallel=False):
    """x: (N, in_s) f32, w: (out_s, in_s) f32 (unused), b: (1,) f32 -> (N, in_s) f32.

    The reference module discards the result of linear(x, w_t, ...), so `w`
    is accepted only for API parity; the live computation is x + b.
    Set core_parallel=True on v7x to shard the row stream across both TCs.
    """
    del w  # dead per reference semantics: linear() result is never used

    orig_shape = x.shape
    total = x.size

    # Lane-dense slab: pad only to the 128-lane boundary (<= 127 elements);
    # aligned sizes pay nothing and the reshape is a free bitcast, which keeps
    # the input_output_aliases / donation chain fully in place.
    rows = pl.cdiv(total, LANE)
    pad = rows * LANE - total
    x_flat = x.reshape(-1)
    if pad:
        x_flat = jnp.pad(x_flat, (0, pad))
    x2d = x_flat.reshape(rows, LANE)

    # Block rows: whole array if it fits in one block (block_shape == full dims,
    # so no (8,128) divisibility needed), else tm (multiple of 8).  A partial
    # last block is masked by Pallas, so no row padding to a tm multiple.
    tm_eff = rows if rows <= tm else tm
    grid = (pl.cdiv(rows, tm_eff),)

    # v7x: CORE_PARALLEL shards the row axis across both TensorCores.  Plain
    # "parallel" is the safe default on single-TC parts (v5e/v6e).
    semantics = (pltpu.CORE_PARALLEL,) if core_parallel else ("parallel",)

    out2d = pl.pallas_call(
        add_bias_kernel,
        out_shape=jax.ShapeDtypeStruct((rows, LANE), x.dtype),
        grid=grid,
        in_specs=[
            pl.BlockSpec((tm_eff, LANE), lambda i: (i, 0)),        # x tile
            pl.BlockSpec(memory_space=pltpu.MemorySpace.SMEM),     # scalar bias
        ],
        out_specs=pl.BlockSpec((tm_eff, LANE), lambda i: (i, 0)),
        # Matches the reference in-place `x += b`; with donation (see jit below)
        # the kernel is exactly one HBM read + one HBM write of x.
        input_output_aliases={0: 0},
        compiler_params=pltpu.CompilerParams(dimension_semantics=semantics),
        # TODO(synk): optionally sweep pipeline_mode=pl.Buffered(3) on the x
        # input spec if xprof shows exposed input DMA contending with writeback.
    )(x2d, b)

    if pad:
        return out2d.reshape(-1)[:total].reshape(orig_shape)
    return out2d.reshape(orig_shape)


# Donate x so the aliased output is truly in place (no defensive copy by XLA).
mylinear_forward_jit = jax.jit(
    mylinear_forward,
    donate_argnums=(0,),
    static_argnames=("tm", "core_parallel"),
)


if __name__ == "__main__":
    # Silence the benign "donated buffers were not usable" warning if XLA
    # cannot alias on some backend; it is a perf note, not an error.
    warnings.filterwarnings("ignore", message=".*donated.*")

    key = jax.random.PRNGKey(0)
    kx, kw, kb = jax.random.split(key, 3)

    N, in_s, out_s = 8, 32, 16

    x = jax.random.uniform(kx, (N, in_s), dtype=jnp.float32)
    w = jax.random.uniform(kw, (out_s, in_s), dtype=jnp.float32)  # torch.rand([out,in])
    b = jax.random.uniform(kb, (1,), dtype=jnp.float32)           # torch.rand(1)

    # Reference computed BEFORE the kernel call: x is donated (in-place semantics).
    y_ref = x + b[0]
    jax.block_until_ready(y_ref)

    y = mylinear_forward_jit(x, w, b)
    jax.block_until_ready(y)

    assert y.shape == (N, in_s)
    assert jnp.allclose(y, y_ref, atol=1e-6), "mismatch vs reference x + b"

    print("KERNEL_OK")
</pallas_src>

<mosaic_0001>
module attributes {stable_mosaic.version = 11 : i64} {
  func.func @add_bias_kernel(%arg0: i32, %arg1: memref<2x128xf32, #tpu.memory_space<vmem>>, %arg2: memref<1xf32, #tpu.memory_space<smem>>, %arg3: memref<2x128xf32, #tpu.memory_space<vmem>>) attributes {dimension_semantics = [#tpu.dimension_semantics<parallel>], iteration_bounds = array<i64: 1>, scalar_prefetch = 0 : i64, scratch_operands = 0 : i64, tpu.core_type = #tpu.core_type<tc>, window_params = [{transform_indices = @transform_0, window_bounds = array<i64: 2, 128>}, {transform_indices = @transform_1, window_bounds = array<i64: 1>}, {transform_indices = @transform_2, window_bounds = array<i64: 2, 128>}]} {
    %c0 = arith.constant 0 : index
    %c0_0 = arith.constant 0 : index
    %0 = vector.load %arg1[%c0, %c0_0] : memref<2x128xf32, #tpu.memory_space<vmem>>, vector<2x128xf32>
    %c0_1 = arith.constant 0 : index
    %1 = memref.load %arg2[%c0_1] : memref<1xf32, #tpu.memory_space<smem>>
    %2 = vector.broadcast %1 : f32 to vector<2x128xf32>
    %3 = arith.addf %0, %2 : vector<2x128xf32>
    %c0_2 = arith.constant 0 : index
    %c0_3 = arith.constant 0 : index
    %4 = vector.load %arg3[%c0_2, %c0_3] : memref<2x128xf32, #tpu.memory_space<vmem>>, vector<2x128xf32>
    tpu.vector_store %arg3[%c0_2, %c0_3], %3 {strides = array<i32>} : memref<2x128xf32, #tpu.memory_space<vmem>>, vector<2x128xf32>,
    return
  }
  func.func @transform_0(%arg0: i32) -> (i32, i32) {
    %c0_i32 = arith.constant 0 : i32
    %c0_i32_0 = arith.constant 0 : i32
    return %arg0, %c0_i32 : i32, i32
  }
  func.func @transform_1(%arg0: i32) -> i32 {
    %c0_i32 = arith.constant 0 : i32
    %c0_i32_0 = arith.constant 0 : i32
    return %c0_i32 : i32
  }
  func.func @transform_2(%arg0: i32) -> (i32, i32) {
    %c0_i32 = arith.constant 0 : i32
    %c0_i32_0 = arith.constant 0 : i32
    return %arg0, %c0_i32 : i32, i32
  }
}

</mosaic_0001>

<llo_original>
// kernel: mylinear_forward.1
$region0: #{mylinear_forward.1}
  #allocation0 [shape = 'u32[]', space=smem, size = 0x4, offset = 0x4, fixed_abs, tag = 'smem constant byte address 0x4 - core index']
  #allocation1 [shape = 'u32[144,128]{1,0:T(1,128)}', space=vmem, size = 0x12000, scoped, tag = 'internal scratch']
  #allocation2 [shape = 'f32[1]{0:T(128)S(6)}', space=smem, size = 0x200, scoped, tag = 'scoped memory for mylinear_forward.1']
  %s0 = inlined_call_operand.vmem [shape: f32[2,128], index: 0, kind: input, shape index: {}, may-alias: {0,2}]
  %s1 = inlined_call_operand.<no memory space> [shape: f32[1], index: 1, kind: input, shape index: {}]
  %s2 = inlined_call_operand.vmem [shape: f32[2,128], index: 2, kind: output, shape index: {}, may-alias: {0,2}]
  %s3 = sld [smem:[#allocation0]]
  $region18: #{mylinear_forward.1} parent=0
    _
  %s5 = ssub.s32 1, %s3
  %s6 = scalar_select 0, %s5, %s3
  %7 = sst [smem:[#allocation2]] %s1
  // Predicated region
  $region2: #{mylinear_forward.1} parent=0 // pred_check
    _
  $region3: #{mylinear_forward.1} parent=0 // pred_check_branch
    %9 = sbr.rel (0) target = $region5
  $region4: #{mylinear_forward.1} parent=0 // pred_region
    _
  $region5: #{mylinear_forward.1} parent=0 // pred_fallthru
    _
  // Predicated region
  $region6: #{mylinear_forward.1} parent=0 // pred_check
    _
  $region7: #{mylinear_forward.1} parent=0 // pred_check_branch
    %11 = sbr.rel (0) target = $region9
  $region8: #{mylinear_forward.1} parent=0 // pred_region
    _
  $region9: #{mylinear_forward.1} parent=0 // pred_fallthru
    _
  %v12 = vld [vmem:[%s0] sm:$0x3]
  %s13 = sld [smem:[#allocation2]]
  %v14 = vstv %s13
  %v15 = vadd.f32 %v12, %v14
  %16 = vst [vmem:[%s2] sm:$0x3] %v15
  // Predicated region
  $region10: #{mylinear_forward.1} parent=0 // pred_check
    _
  $region11: #{mylinear_forward.1} parent=0 // pred_check_branch
    %18 = sbr.rel (0) target = $region13
  $region12: #{mylinear_forward.1} parent=0 // pred_region
    _
  $region13: #{mylinear_forward.1} parent=0 // pred_fallthru
    _
  // Predicated region
  $region14: #{mylinear_forward.1} parent=0 // pred_check
    _
  $region15: #{mylinear_forward.1} parent=0 // pred_check_branch
    %20 = sbr.rel (0) target = $region17
  $region16: #{mylinear_forward.1} parent=0 // pred_region
    _
  $region17: #{mylinear_forward.1} parent=0 // pred_fallthru
    _

</llo_original>
